<compile_context>
chip_gen: v6e
topology: v6e:2x2x1
jax: 0.10.0
libtpu: 0.0.40
codegen_flags: <defaults>
</compile_context>

<pallas_src>
import math
from functools import partial

import jax
import jax.numpy as jnp
from jax import lax
from jax.experimental import pallas as pl
from jax.experimental.pallas import tpu as pltpu

_F_CHUNK = 512            # lanes per in-kernel reduction chunk (bounds f32 temp)
_MIB = 1024 * 1024


def _ew_kernel(x_ref, w_ref, b_ref, o_ref, *, f_total, f_chunk):
    """out[b, c] = sum_f x[b, c, f] * w[c, f] + bias[c]  (f32 accumulation)."""
    tb, tc = o_ref.shape

    def chunk_sum(off, size):
        xs = x_ref[:, :, pl.ds(off, size)]
        ws = w_ref[:, pl.ds(off, size)]
        return jnp.sum(xs * ws[None, :, :], axis=-1, dtype=jnp.float32)

    if f_total <= f_chunk:
        # Common case: whole F in one pass.
        acc = jnp.sum(x_ref[...] * w_ref[...][None, :, :], axis=-1,
                      dtype=jnp.float32)
    else:
        n_full = f_total // f_chunk
        rem = f_total % f_chunk
        acc = jnp.zeros((tb, tc), jnp.float32)
        if n_full <= 8:
            # Short static loop: fully visible to the scheduler.
            for i in range(n_full):
                acc = acc + chunk_sum(i * f_chunk, f_chunk)
        else:
            def body(i, a):
                off = pl.multiple_of(i * f_chunk, f_chunk)
                return a + chunk_sum(off, f_chunk)
            acc = lax.fori_loop(0, n_full, body, acc)
        if rem:
            acc = acc + chunk_sum(n_full * f_chunk, rem)

    o_ref[...] = (acc + b_ref[...].astype(jnp.float32)).astype(o_ref.dtype)


def _round_up(x, m):
    return ((x + m - 1) // m) * m


def _vmem_capacity_bytes():
    try:
        return int(pltpu.get_tpu_info().vmem_capacity_bytes)
    except Exception:
        # Conservative fallback: v7x has 64 MiB VMEM per TensorCore.
        return 64 * _MIB


def _choose_tiles(B, C, F, itemsize, target_tile_bytes):
    """Pick (TB, TC): TC multiple of 128 (or == C); TB multiple of 8 (or == B)."""
    # --- TC: bound the weight tile and let TB reach >= 8 within the x budget.
    if 8 * C * F * itemsize <= target_tile_bytes or C <= 128:
        tc = C
    else:
        tc = (target_tile_bytes // (8 * F * itemsize)) // 128 * 128
        tc = max(128, min(tc, C))

    # --- TB from the tile budget (multiple of 8 keeps the output block legal).
    row_bytes = max(1, tc * F * itemsize)
    rows = max(1, target_tile_bytes // row_bytes)
    tb_budget = max(8, (rows // 8) * 8)

    # --- TB from parallelism: prefer >= 2-4 grid steps when B allows
    #     (pipeline overlap; 2 TensorCores on v7x via "parallel" semantics).
    if B >= 32:
        tb_par = _round_up(-(-B // 4), 8)
    elif B >= 16:
        tb_par = _round_up(-(-B // 2), 8)
    else:
        tb_par = B

    tb = min(tb_budget, tb_par)
    if tb >= B:
        tb = B
    return tb, tc


def element_wise_layer(x, weight, bias=None, *, target_tile_bytes=None):
    """x: (B, C, F), weight: (C, F), bias: (C,) or None -> (B, C)."""
    B, C, F = x.shape
    assert weight.shape == (C, F)
    if bias is None:
        bias = jnp.zeros((C,), dtype=x.dtype)
    bias2d = bias.reshape(1, C)

    isz = jnp.dtype(x.dtype).itemsize
    osz = isz

    vmem_cap = _vmem_capacity_bytes()
    if target_tile_bytes is None:
        # ~18 MiB on 128 MiB VMEM (v5e/v6e), ~9 MiB on 64 MiB (v7x): big DMAs
        # that amortize per-step overhead while leaving room for double
        # buffering plus the f32 reduction temporary.
        target_tile_bytes = max(256 * 1024, int(0.85 * vmem_cap) // 6)

    TB, TC = _choose_tiles(B, C, F, isz, target_tile_bytes)
    GB = -(-B // TB)
    GC = -(-C // TC)

    # Declared VMEM limit: cover the actual per-step footprint, capped at ~90%
    # of this generation's physical VMEM.
    footprint = (2 * TB * TC * F * isz              # x tile, double buffered
                 + 2 * TC * F * isz                 # weight tile
                 + 2 * TB * TC * osz                # output tile
                 + TB * TC * min(F, _F_CHUNK) * 4   # f32 product temporary
                 + 2 * _MIB)                        # bias + headroom
    vmem_limit = min(int(0.90 * vmem_cap), max(int(0.85 * vmem_cap), footprint))

    cost = pl.CostEstimate(
        flops=2 * B * C * F,
        transcendentals=0,
        bytes_accessed=isz * (B * C * F + C * F + C) + osz * B * C,
    )

    kernel = partial(_ew_kernel, f_total=F, f_chunk=_F_CHUNK)

    # Grid = (C tiles, batch tiles): C outermost so the weight block index is
    # constant across all inner batch steps (no weight re-DMA).  Both axes are
    # independent -> "parallel".  Ragged last blocks over-run the arrays: the
    # reads are clamped and OOB output rows are masked, so no pad / extra HBM
    # copy of x is needed.
    out = pl.pallas_call(
        kernel,
        out_shape=jax.ShapeDtypeStruct((B, C), x.dtype),
        grid_spec=pltpu.PrefetchScalarGridSpec(
            num_scalar_prefetch=0,
            grid=(GC, GB),
            in_specs=[
                pl.BlockSpec((TB, TC, F), lambda gc, gb: (gb, gc, 0)),   # x
                pl.BlockSpec((TC, F),     lambda gc, gb: (gc, 0)),       # weight
                pl.BlockSpec((1, TC),     lambda gc, gb: (0, gc)),       # bias
            ],
            out_specs=pl.BlockSpec((TB, TC), lambda gc, gb: (gb, gc)),
        ),
        compiler_params=pltpu.CompilerParams(
            dimension_semantics=("parallel", "parallel"),
            vmem_limit_bytes=vmem_limit,
        ),
        cost_estimate=cost,
    )(x, weight, bias2d)
    return out


if __name__ == "__main__":
    key = jax.random.PRNGKey(0)

    # --- 1) Small shapes consistent with the module's forward ----------------
    B, in_features, out_features = 2, 8, 32
    kx, kw, kb = jax.random.split(key, 3)
    stdv = 1.0 / math.sqrt(out_features)             # reset_parameters() init
    weight = jax.random.uniform(
        kw, (in_features, out_features), jnp.float32, -stdv, stdv)
    bias = jax.random.uniform(kb, (in_features,), jnp.float32, -stdv, stdv)
    x = jax.random.normal(kx, (B, in_features, out_features), jnp.float32)

    out = jax.block_until_ready(element_wise_layer(x, weight, bias))
    ref = jnp.sum(x * weight[None, :, :], axis=2) + bias[None, :]
    assert out.shape == (B, in_features)
    assert jnp.allclose(out, ref, atol=1e-5, rtol=1e-5), "mismatch (small)"

    # --- 2) Multi-step batch grid with ragged last block (67 % 8 != 0), no pad
    B2, C2, F2 = 67, 16, 128
    k2x, k2w, k2b = jax.random.split(jax.random.PRNGKey(1), 3)
    stdv2 = 1.0 / math.sqrt(F2)
    w2 = jax.random.uniform(k2w, (C2, F2), jnp.float32, -stdv2, stdv2)
    b2 = jax.random.uniform(k2b, (C2,), jnp.float32, -stdv2, stdv2)
    x2 = jax.random.normal(k2x, (B2, C2, F2), jnp.float32)
    out2 = jax.block_until_ready(
        element_wise_layer(x2, w2, b2, target_tile_bytes=64 * 1024))
    ref2 = jnp.sum(x2 * w2[None, :, :], axis=2) + b2[None, :]
    assert out2.shape == (B2, C2)
    assert jnp.allclose(out2, ref2, atol=1e-4, rtol=1e-4), "mismatch (ragged)"

    # --- 3) C-tiled path (C > 128, tiny tile budget), bias=None --------------
    B3, C3, F3 = 16, 256, 128
    k3x, k3w = jax.random.split(jax.random.PRNGKey(2), 2)
    stdv3 = 1.0 / math.sqrt(F3)
    w3 = jax.random.uniform(k3w, (C3, F3), jnp.float32, -stdv3, stdv3)
    x3 = jax.random.normal(k3x, (B3, C3, F3), jnp.float32)
    out3 = jax.block_until_ready(
        element_wise_layer(x3, w3, None, target_tile_bytes=256 * 1024))
    ref3 = jnp.sum(x3 * w3[None, :, :], axis=2)
    assert out3.shape == (B3, C3)
    assert jnp.allclose(out3, ref3, atol=1e-4, rtol=1e-4), "mismatch (C-tiled)"

    print("KERNEL_OK")
</pallas_src>

<mosaic_0001>
module attributes {stable_mosaic.version = 11 : i64} {
  func.func @_ew_kernel(%arg0: i32, %arg1: i32, %arg2: memref<2x8x32xf32, #tpu.memory_space<vmem>>, %arg3: memref<8x32xf32, #tpu.memory_space<vmem>>, %arg4: memref<1x8xf32, #tpu.memory_space<vmem>>, %arg5: memref<2x8xf32, #tpu.memory_space<vmem>>) attributes {dimension_semantics = [#tpu.dimension_semantics<parallel>, #tpu.dimension_semantics<parallel>], iteration_bounds = array<i64: 1, 1>, scalar_prefetch = 0 : i64, scratch_operands = 0 : i64, tpu.core_type = #tpu.core_type<tc>, window_params = [{transform_indices = @transform_0, window_bounds = array<i64: 2, 8, 32>}, {transform_indices = @transform_1, window_bounds = array<i64: 8, 32>}, {transform_indices = @transform_2, window_bounds = array<i64: 1, 8>}, {transform_indices = @transform_3, window_bounds = array<i64: 2, 8>}]} {
    %c0 = arith.constant 0 : index
    %c0_0 = arith.constant 0 : index
    %c0_1 = arith.constant 0 : index
    %0 = vector.load %arg2[%c0, %c0_0, %c0_1] : memref<2x8x32xf32, #tpu.memory_space<vmem>>, vector<2x8x32xf32>
    %c0_2 = arith.constant 0 : index
    %c0_3 = arith.constant 0 : index
    %1 = vector.load %arg3[%c0_2, %c0_3] : memref<8x32xf32, #tpu.memory_space<vmem>>, vector<8x32xf32>
    %2 = vector.shape_cast %1 : vector<8x32xf32> to vector<1x8x32xf32>
    %3 = vector.broadcast %2 : vector<1x8x32xf32> to vector<2x8x32xf32>
    %4 = arith.mulf %0, %3 : vector<2x8x32xf32>
    %cst = arith.constant dense<0.000000e+00> : vector<2x8xf32>
    %5 = vector.multi_reduction <add>, %4, %cst [2] : vector<2x8x32xf32> to vector<2x8xf32>
    %c0_4 = arith.constant 0 : index
    %c0_5 = arith.constant 0 : index
    %6 = vector.load %arg4[%c0_4, %c0_5] : memref<1x8xf32, #tpu.memory_space<vmem>>, vector<1x8xf32>
    %7 = vector.broadcast %6 : vector<1x8xf32> to vector<2x8xf32>
    %8 = arith.addf %5, %7 : vector<2x8xf32>
    %c0_6 = arith.constant 0 : index
    %c0_7 = arith.constant 0 : index
    %9 = vector.load %arg5[%c0_6, %c0_7] : memref<2x8xf32, #tpu.memory_space<vmem>>, vector<2x8xf32>
    tpu.vector_store %arg5[%c0_6, %c0_7], %8 {strides = array<i32>} : memref<2x8xf32, #tpu.memory_space<vmem>>, vector<2x8xf32>,
    return
  }
  func.func @transform_0(%arg0: i32, %arg1: i32) -> (i32, i32, i32) {
    %c0_i32 = arith.constant 0 : i32
    %c0_i32_0 = arith.constant 0 : i32
    return %arg1, %arg0, %c0_i32 : i32, i32, i32
  }
  func.func @transform_1(%arg0: i32, %arg1: i32) -> (i32, i32) {
    %c0_i32 = arith.constant 0 : i32
    %c0_i32_0 = arith.constant 0 : i32
    return %arg0, %c0_i32 : i32, i32
  }
  func.func @transform_2(%arg0: i32, %arg1: i32) -> (i32, i32) {
    %c0_i32 = arith.constant 0 : i32
    %c0_i32_0 = arith.constant 0 : i32
    return %c0_i32, %arg0 : i32, i32
  }
  func.func @transform_3(%arg0: i32, %arg1: i32) -> (i32, i32) {
    %c0_i32 = arith.constant 0 : i32
    return %arg1, %arg0 : i32, i32
  }
}

</mosaic_0001>

<llo_original>
// kernel: tpu_custom_call.1
$region0: #{tpu_custom_call.1}
  #allocation0 [shape = 'u32[]', space=smem, size = 0x4, offset = 0x4, fixed_abs, tag = 'smem constant byte address 0x4 - core index']
  #allocation1 [shape = 'u32[144,128]{1,0:T(1,128)}', space=vmem, size = 0x12000, scoped, tag = 'internal scratch']
  %s0 = inlined_call_operand.hbm [shape: f32[2,8,32], index: 0, kind: input, shape index: {}]
  %s1 = inlined_call_operand.hbm [shape: f32[8,32], index: 1, kind: input, shape index: {}]
  %s2 = inlined_call_operand.vmem [shape: f32[1,8], index: 2, kind: input, shape index: {}]
  %s3 = inlined_call_operand.hbm [shape: f32[2,8], index: 3, kind: output, shape index: {}]
  %s4 = sld [smem:[#allocation0]]
  $region30: #{tpu_custom_call.1} parent=0
    _
  %s6 = ssub.s32 1, %s4
  %s7 = scalar_select 0, %s6, %s4
  $region1: #{tpu_custom_call.1} parent=0
    #allocation2 [shape = 'u8[8192]{0}', space=vmem, size = 0x2000, scoped, tag = 'input window, operand 0, single buffered']
    #allocation3 [shape = 's32[1]{0}', space=sflag, size = 0x4, scoped, tag = 'scoped memory for tpu_custom_call.1']
    #allocation4 [shape = 's32[1]{0}', space=sflag, size = 0x4, scoped, tag = 'scoped memory for tpu_custom_call.1']
    #allocation5 [shape = 'u8[4096]{0}', space=vmem, size = 0x1000, scoped, tag = 'input window, operand 1, single buffered']
    #allocation6 [shape = 's32[1]{0}', space=sflag, size = 0x4, scoped, tag = 'scoped memory for tpu_custom_call.1']
    #allocation7 [shape = 'u8[1024]{0}', space=vmem, size = 0x400, scoped, tag = 'output window, operand 0, single buffered']
    %8 = vsyncpa [#allocation3], 0
    %9 = vsyncpa [#allocation6], 0
    %10 = vsyncpa [#allocation4], 0
    // Predicated region
    $region2: #{tpu_custom_call.1} parent=1 // pred_check
      _
    $region3: #{tpu_custom_call.1} parent=1 // pred_check_branch
      %12 = sbr.rel (0) target = $region5
    $region4: #{tpu_custom_call.1} parent=1 // pred_region
      %s14 = ssub.s32 256, 256
      %15 = vsyncadd [#allocation3], %s14
      %s16 = sshll.u32 [#allocation2], 4
      %s17 = int_to_ptr.vmem [resolvable:$true] %s16
      %22 = dma.hbm_to_vmem [thread:$0]  %s0, 256, %s17, [#allocation3], 128, 128, 8
    $region5: #{tpu_custom_call.1} parent=1 // pred_fallthru
      _
    // Predicated region
    $region6: #{tpu_custom_call.1} parent=1 // pred_check
      _
    $region7: #{tpu_custom_call.1} parent=1 // pred_check_branch
      %24 = sbr.rel (0) target = $region9
    $region8: #{tpu_custom_call.1} parent=1 // pred_region
      %s26 = ssub.s32 128, 128
      %27 = vsyncadd [#allocation6], %s26
      %s29 = sshll.u32 [#allocation5], 4
      %s30 = int_to_ptr.vmem [resolvable:$true] %s29
      %32 = dma.hbm_to_vmem [thread:$0]  %s1, 128, %s30, [#allocation6]
    $region9: #{tpu_custom_call.1} parent=1 // pred_fallthru
      _
    // Predicated region
    $region10: #{tpu_custom_call.1} parent=1 // pred_check
      _
    $region11: #{tpu_custom_call.1} parent=1 // pred_check_branch
      %34 = sbr.rel (0) target = $region13
    $region12: #{tpu_custom_call.1} parent=1 // pred_region
      _
    $region13: #{tpu_custom_call.1} parent=1 // pred_fallthru
      _
    // Predicated region
    $region14: #{tpu_custom_call.1} parent=1 // pred_check
      _
    $region15: #{tpu_custom_call.1} parent=1 // pred_check_branch
      %36 = sbr.rel (0) target = $region17
    $region16: #{tpu_custom_call.1} parent=1 // pred_region
      %37 = dma.done [#allocation3], 256
    $region17: #{tpu_custom_call.1} parent=1 // pred_fallthru
      _
    // Predicated region
    $region18: #{tpu_custom_call.1} parent=1 // pred_check
      _
    $region19: #{tpu_custom_call.1} parent=1 // pred_check_branch
      %39 = sbr.rel (0) target = $region21
    $region20: #{tpu_custom_call.1} parent=1 // pred_region
      %40 = dma.done [#allocation6], 128
    $region21: #{tpu_custom_call.1} parent=1 // pred_fallthru
      _
    %v41 = vld [vmem:[#allocation2] sm:$0xff]
    %v42 = vld [vmem:[#allocation2 + $0x8] sm:$0xff]
    %v43 = vld [vmem:[#allocation5] sm:$0xff]
    %v44 = vmul.f32 %v41, %v43
    %v45 = vmul.f32 %v42, %v43
    %vm46 = vcmask 261120
    %v47 = vsel %vm46, %v44, 0.0
    %48 = vadd.xlane.f32.xlu0 %v47
    %v49 = vpop.xlane.xlu0 %48
    %v50 = vsel %vm46, %v45, 0.0
    %51 = vadd.xlane.f32.xlu0 %v50
    %v52 = vpop.xlane.xlu0 %51
    %v53 = vld [vmem:[%s2] sm:$0x1]
    %v55 = vlaneseq
    %v56 = vshrl.u32 %v55, 7
    %v57 = vsub.s32 0, %v56
    %v58 = vrot.slane %v53, %v57
    %60 = vbcast.lane.b32.xlu0 %v58, 256
    %v61 = vpop.permute.xlu0 %60
    %v63 = vadd.f32 %v49, %v61
    %v64 = vadd.f32 %v52, %v61
    %67 = vset.pattern.permute.xlu0 0
    %68 = vperm.xlu0 %67, %v63
    %v69 = vpop.permute.xlu0 %68
    %70 = vset.pattern.permute.xlu0 0
    %71 = vperm.xlu0 %70, %v64
    %v72 = vpop.permute.xlu0 %71
    %v73 = vlaneseq
    %v74 = vand.u32 %v73, 127
    %v75 = vlaneseq
    %v76 = vshrl.u32 %v75, 7
    %v77 = vsub.s32 %v74, %v76
    %v78 = vrot.slane %v69, %v77
    %v79 = vlaneseq
    %v80 = vshrl.u32 %v79, 7
    %v81 = vsub.s32 %v74, %v80
    %v82 = vrot.slane %v72, %v81
    %vm83 = vcmask 1041409
    %v84 = vsel %vm83, %v82, %v78
    %vm86 = vcmask 58368
    %87 = vst.msk [vmem:[#allocation7] sm:$0x3] %vm86, %v84
    // Predicated region
    $region22: #{tpu_custom_call.1} parent=1 // pred_check
      _
    $region23: #{tpu_custom_call.1} parent=1 // pred_check_branch
      %89 = sbr.rel (0) target = $region25
    $region24: #{tpu_custom_call.1} parent=1 // pred_region
      %s91 = ssub.s32 32, 32
      %92 = vsyncadd [#allocation4], %s91
      %s94 = sshll.u32 [#allocation7], 4
      %s95 = int_to_ptr.vmem [resolvable:$true] %s94
      %97 = dma.vmem_to_hbm [thread:$0]  %s95, 32, %s3, [#allocation4]
    $region25: #{tpu_custom_call.1} parent=1 // pred_fallthru
      _
    // Predicated region
    $region26: #{tpu_custom_call.1} parent=1 // pred_check
      _
    $region27: #{tpu_custom_call.1} parent=1 // pred_check_branch
      %99 = sbr.rel (0) target = $region29
    $region28: #{tpu_custom_call.1} parent=1 // pred_region
      %100 = dma.done [#allocation4], 32
    $region29: #{tpu_custom_call.1} parent=1 // pred_fallthru
      _
    %101 = vsyncpa [#allocation3], 1
    %102 = vsyncpa [#allocation6], 1
    %103 = vsyncpa [#allocation4], 1

</llo_original>
